<compile_context>
chip_gen: v7x
topology: tpu7x:2x2x1
jax: 0.10.0
libtpu: 0.0.40
codegen_flags: <defaults>
</compile_context>

<pallas_src>
import jax
import jax.numpy as jnp
from jax.experimental import pallas as pl
from jax.experimental.pallas import tpu as pltpu


def _embed_kernel(ids_ref, word_ref, pos_ref, out_ref):
    """One (token-tile t, batch b) grid step.

    ids_ref : SMEM (B * S_pad,) int32   scalar-prefetched token ids (flat, pre-clamped)
    word_ref: VMEM (V, Dp)              word-embedding table (resident)
    pos_ref : VMEM (TS, Dp)             positional slab for tile t (reused across batch)
    out_ref : VMEM (TS, Dp)             output tile (batch dim squeezed)
    """
    t = pl.program_id(0)
    b = pl.program_id(1)
    ts, d = out_ref.shape
    s_pad = pl.num_programs(0) * ts
    base = b * s_pad + t * ts

    # Sublane-index pattern of an 8-row group (loop invariant, cheap iota).
    row_iota = jax.lax.broadcasted_iota(jnp.int32, (8, d), 0)

    def group_body(g, carry):
        g8 = pl.multiple_of(g * 8, 8)
        # Gather 8 word rows and pack them into one dense (8, D) block using
        # sublane broadcast + select (VPU) instead of 8 masked (1, D) stores.
        acc = jnp.zeros((8, d), jnp.float32)
        for j in range(8):                                   # static 8-wide unroll
            tok = ids_ref[base + g8 + j]
            row = word_ref[pl.ds(tok, 1), :].astype(jnp.float32)   # (1, d)
            acc = jnp.where(row_iota == j, row, acc)
        # Fused positional add in f32, single dense sublane-aligned store.
        acc = acc + pos_ref[pl.ds(g8, 8), :].astype(jnp.float32)
        out_ref[pl.ds(g8, 8), :] = acc.astype(out_ref.dtype)
        return carry

    jax.lax.fori_loop(0, ts // 8, group_body, 0)
    # TODO(synk): dropout is identity in eval mode; a train-mode version would
    # mask here with pltpu.prng_seed / pltpu.prng_random_bits.


def _vmem_limit_bytes(needed):
    """Per-generation VMEM cap (v5e/v6e ~128 MiB physical, v7x 64 MiB)."""
    try:
        cap = int(pltpu.get_tpu_info().vmem_capacity_bytes)
    except Exception:
        cap = 64 << 20                           # safe on every generation
    usable = max(cap - (8 << 20), 16 << 20)      # leave compiler headroom
    return int(min(max(needed, 16 << 20), usable))


def embeddings_forward(input_ids, word_emb, pos_emb, *, tile_tokens=256):
    """Pallas equivalent of Embeddings.forward (eval mode: dropout = identity)."""
    B, S = input_ids.shape
    V, D = word_emb.shape
    Smax, D_pos = pos_emb.shape
    assert D == D_pos, "embedding_dim mismatch between tables"
    assert S <= Smax, "sequence longer than positional-embedding table"

    out_dtype = jnp.promote_types(word_emb.dtype, pos_emb.dtype)

    # ---- lane-align D so output stores are full-lane (unmasked) vst ---------
    Dp = ((D + 127) // 128) * 128
    if Dp != D:
        word_emb = jnp.pad(word_emb, ((0, 0), (0, Dp - D)))
        pos_emb = jnp.pad(pos_emb, ((0, 0), (0, Dp - D)))

    # ---- token tile: multiple of 8 -> sublane-dense output blocks -----------
    TS = max(8, min(int(tile_tokens), ((S + 7) // 8) * 8))
    TS = (TS // 8) * 8
    S_pad = ((S + TS - 1) // TS) * TS
    n_tiles = S_pad // TS

    # ---- ids: clamp ONCE here (removes per-row clip from the inner loop) ----
    ids = jnp.clip(input_ids.astype(jnp.int32), 0, V - 1)
    if S_pad != S:
        ids = jnp.pad(ids, ((0, 0), (0, S_pad - S)))
    ids_flat = ids.reshape(-1)                   # 1-D -> minimal SMEM padding
    # TODO(synk): for very large B*S, pass ids as per-tile SMEM BlockSpec blocks
    # instead of one scalar-prefetch array (avoids SMEM padding blow-up).

    # ---- positional slab covering the padded sequence ------------------------
    pos = pos_emb[:S]
    if pos.shape[0] != S_pad:
        pos = jnp.pad(pos, ((0, S_pad - pos.shape[0]), (0, 0)))

    # ---- VMEM budget ----------------------------------------------------------
    word_bytes = V * Dp * jnp.dtype(word_emb.dtype).itemsize
    tile_bytes = TS * Dp * 4
    vmem_limit = _vmem_limit_bytes(word_bytes + 6 * tile_bytes + (2 << 20))
    # TODO(synk): for vocab tables too large to keep VMEM-resident (esp. v7x,
    # 64 MiB/TC) add a D-tiling grid axis or fall back to a manually pipelined
    # per-row HBM DMA gather (memory_space=pl.ANY + pltpu.make_async_copy).

    def run(word_spec):
        grid_spec = pltpu.PrefetchScalarGridSpec(
            num_scalar_prefetch=1,               # flattened ids -> SMEM
            grid=(n_tiles, B),                   # batch innermost: pos slab reused
            in_specs=[
                word_spec,                                             # word table
                pl.BlockSpec((TS, Dp), lambda t, b, ids: (t, 0)),      # pos slab
            ],
            out_specs=pl.BlockSpec((None, TS, Dp), lambda t, b, ids: (b, t, 0)),
        )
        return pl.pallas_call(
            _embed_kernel,
            out_shape=jax.ShapeDtypeStruct((B, S_pad, Dp), out_dtype),
            grid_spec=grid_spec,
            compiler_params=pltpu.CompilerParams(
                dimension_semantics=("parallel", "parallel"),
                vmem_limit_bytes=vmem_limit,
            ),
        )(ids_flat, word_emb, pos)

    # Preferred: single-buffered resident word table (constant index_map ->
    # DMA'd once; Buffered(1) halves its VMEM footprint).  Fall back to the
    # default (double-buffered) spec if this Pallas build rejects it.
    word_specs = []
    try:
        word_specs.append(
            pl.BlockSpec((V, Dp), lambda t, b, ids: (0, 0),
                         pipeline_mode=pl.Buffered(1)))
    except Exception:
        pass
    word_specs.append(pl.BlockSpec((V, Dp), lambda t, b, ids: (0, 0)))

    out, err = None, None
    for ws in word_specs:
        try:
            out = run(ws)
            break
        except Exception as e:                   # lowering/compile rejection
            err = e
    if out is None:
        raise err

    if S_pad != S or Dp != D:
        out = out[:, :S, :D]
    return out


if __name__ == "__main__":
    # Small config consistent with the module's __init__
    config = dict(
        vocab_size=64,
        max_seq_len=16,
        embedding_dim=128,
        transformer_dim=128,
        dropout_prob=0.1,   # dropout is identity in eval mode
    )
    B, S = 2, 8
    V, D = config["vocab_size"], config["embedding_dim"]
    Smax = config["max_seq_len"]

    key = jax.random.PRNGKey(0)
    k_word, k_pos, k_ids = jax.random.split(key, 3)

    # Deterministic parameter init, matching torch.nn.init.normal_(std=0.02)
    word_emb = (0.02 * jax.random.normal(k_word, (V, D))).astype(jnp.float32)
    pos_emb = (0.02 * jax.random.normal(k_pos, (Smax, D))).astype(jnp.float32)

    input_ids = jax.random.randint(k_ids, (B, S), 0, V, dtype=jnp.int32)

    out = embeddings_forward(input_ids, word_emb, pos_emb)
    out = jax.block_until_ready(out)

    # Pure-JAX reference check
    ref = word_emb[input_ids] + pos_emb[jnp.arange(S)][None, :, :]
    assert out.shape == (B, S, D)
    assert jnp.allclose(out, ref, atol=1e-6), float(jnp.abs(out - ref).max())

    print("KERNEL_OK")
</pallas_src>

<mosaic_0001>
module attributes {stable_mosaic.version = 11 : i64} {
  func.func @_embed_kernel(%arg0: i32, %arg1: i32, %arg2: memref<16xi32, #tpu.memory_space<smem>>, %arg3: memref<64x128xf32, #tpu.memory_space<vmem>>, %arg4: memref<8x128xf32, #tpu.memory_space<vmem>>, %arg5: memref<1x8x128xf32, #tpu.memory_space<vmem>>) attributes {dimension_semantics = [#tpu.dimension_semantics<parallel>, #tpu.dimension_semantics<parallel>], iteration_bounds = array<i64: 1, 2>, scalar_prefetch = 1 : i64, scratch_operands = 0 : i64, tpu.core_type = #tpu.core_type<tc>, window_params = [{pipeline_mode = #tpu.pipeline_mode<synchronous>, transform_indices = @transform_0, window_bounds = array<i64: 64, 128>}, {transform_indices = @transform_1, window_bounds = array<i64: 8, 128>}, {transform_indices = @transform_2, window_bounds = array<i64: 1, 8, 128>}]} {
    %c8_i32 = arith.constant 8 : i32
    %0 = arith.muli %arg1, %c8_i32 : i32
    %c8_i32_0 = arith.constant 8 : i32
    %1 = arith.muli %arg0, %c8_i32_0 : i32
    %2 = arith.addi %0, %1 : i32
    %3 = tpu.iota {dimensions = array<i32: 0>} : vector<8x128xi32>
    %c0_i32 = arith.constant 0 : i32
    %c8_i32_1 = arith.constant 8 : i32
    %4 = arith.muli %c0_i32, %c8_i32_1 : i32
    %5 = tpu.assume_multiple %4, 8 : i32
    %cst = arith.constant 0.000000e+00 : f32
    %6 = vector.broadcast %cst : f32 to vector<8x128xf32>
    %7 = arith.addi %2, %5 : i32
    %c0_i32_2 = arith.constant 0 : i32
    %8 = arith.addi %7, %c0_i32_2 : i32
    %9 = arith.index_cast %8 : i32 to index
    %10 = memref.load %arg2[%9] : memref<16xi32, #tpu.memory_space<smem>>
    %11 = arith.index_cast %10 : i32 to index
    %c0 = arith.constant 0 : index
    %12 = vector.load %arg3[%11, %c0] : memref<64x128xf32, #tpu.memory_space<vmem>>, vector<1x128xf32>
    %c0_i32_3 = arith.constant 0 : i32
    %13 = vector.broadcast %c0_i32_3 : i32 to vector<8x128xi32>
    %14 = arith.cmpi eq, %3, %13 : vector<8x128xi32>
    %15 = vector.shape_cast %12 : vector<1x128xf32> to vector<1x128xf32>
    %16 = vector.broadcast %15 : vector<1x128xf32> to vector<8x128xf32>
    %17 = arith.select %14, %16, %6 : vector<8x128xi1>, vector<8x128xf32>
    %18 = arith.addi %2, %5 : i32
    %c1_i32 = arith.constant 1 : i32
    %19 = arith.addi %18, %c1_i32 : i32
    %20 = arith.index_cast %19 : i32 to index
    %21 = memref.load %arg2[%20] : memref<16xi32, #tpu.memory_space<smem>>
    %22 = arith.index_cast %21 : i32 to index
    %c0_4 = arith.constant 0 : index
    %23 = vector.load %arg3[%22, %c0_4] : memref<64x128xf32, #tpu.memory_space<vmem>>, vector<1x128xf32>
    %c1_i32_5 = arith.constant 1 : i32
    %24 = vector.broadcast %c1_i32_5 : i32 to vector<8x128xi32>
    %25 = arith.cmpi eq, %3, %24 : vector<8x128xi32>
    %26 = vector.shape_cast %23 : vector<1x128xf32> to vector<1x128xf32>
    %27 = vector.broadcast %26 : vector<1x128xf32> to vector<8x128xf32>
    %28 = arith.select %25, %27, %17 : vector<8x128xi1>, vector<8x128xf32>
    %29 = arith.addi %2, %5 : i32
    %c2_i32 = arith.constant 2 : i32
    %30 = arith.addi %29, %c2_i32 : i32
    %31 = arith.index_cast %30 : i32 to index
    %32 = memref.load %arg2[%31] : memref<16xi32, #tpu.memory_space<smem>>
    %33 = arith.index_cast %32 : i32 to index
    %c0_6 = arith.constant 0 : index
    %34 = vector.load %arg3[%33, %c0_6] : memref<64x128xf32, #tpu.memory_space<vmem>>, vector<1x128xf32>
    %c2_i32_7 = arith.constant 2 : i32
    %35 = vector.broadcast %c2_i32_7 : i32 to vector<8x128xi32>
    %36 = arith.cmpi eq, %3, %35 : vector<8x128xi32>
    %37 = vector.shape_cast %34 : vector<1x128xf32> to vector<1x128xf32>
    %38 = vector.broadcast %37 : vector<1x128xf32> to vector<8x128xf32>
    %39 = arith.select %36, %38, %28 : vector<8x128xi1>, vector<8x128xf32>
    %40 = arith.addi %2, %5 : i32
    %c3_i32 = arith.constant 3 : i32
    %41 = arith.addi %40, %c3_i32 : i32
    %42 = arith.index_cast %41 : i32 to index
    %43 = memref.load %arg2[%42] : memref<16xi32, #tpu.memory_space<smem>>
    %44 = arith.index_cast %43 : i32 to index
    %c0_8 = arith.constant 0 : index
    %45 = vector.load %arg3[%44, %c0_8] : memref<64x128xf32, #tpu.memory_space<vmem>>, vector<1x128xf32>
    %c3_i32_9 = arith.constant 3 : i32
    %46 = vector.broadcast %c3_i32_9 : i32 to vector<8x128xi32>
    %47 = arith.cmpi eq, %3, %46 : vector<8x128xi32>
    %48 = vector.shape_cast %45 : vector<1x128xf32> to vector<1x128xf32>
    %49 = vector.broadcast %48 : vector<1x128xf32> to vector<8x128xf32>
    %50 = arith.select %47, %49, %39 : vector<8x128xi1>, vector<8x128xf32>
    %51 = arith.addi %2, %5 : i32
    %c4_i32 = arith.constant 4 : i32
    %52 = arith.addi %51, %c4_i32 : i32
    %53 = arith.index_cast %52 : i32 to index
    %54 = memref.load %arg2[%53] : memref<16xi32, #tpu.memory_space<smem>>
    %55 = arith.index_cast %54 : i32 to index
    %c0_10 = arith.constant 0 : index
    %56 = vector.load %arg3[%55, %c0_10] : memref<64x128xf32, #tpu.memory_space<vmem>>, vector<1x128xf32>
    %c4_i32_11 = arith.constant 4 : i32
    %57 = vector.broadcast %c4_i32_11 : i32 to vector<8x128xi32>
    %58 = arith.cmpi eq, %3, %57 : vector<8x128xi32>
    %59 = vector.shape_cast %56 : vector<1x128xf32> to vector<1x128xf32>
    %60 = vector.broadcast %59 : vector<1x128xf32> to vector<8x128xf32>
    %61 = arith.select %58, %60, %50 : vector<8x128xi1>, vector<8x128xf32>
    %62 = arith.addi %2, %5 : i32
    %c5_i32 = arith.constant 5 : i32
    %63 = arith.addi %62, %c5_i32 : i32
    %64 = arith.index_cast %63 : i32 to index
    %65 = memref.load %arg2[%64] : memref<16xi32, #tpu.memory_space<smem>>
    %66 = arith.index_cast %65 : i32 to index
    %c0_12 = arith.constant 0 : index
    %67 = vector.load %arg3[%66, %c0_12] : memref<64x128xf32, #tpu.memory_space<vmem>>, vector<1x128xf32>
    %c5_i32_13 = arith.constant 5 : i32
    %68 = vector.broadcast %c5_i32_13 : i32 to vector<8x128xi32>
    %69 = arith.cmpi eq, %3, %68 : vector<8x128xi32>
    %70 = vector.shape_cast %67 : vector<1x128xf32> to vector<1x128xf32>
    %71 = vector.broadcast %70 : vector<1x128xf32> to vector<8x128xf32>
    %72 = arith.select %69, %71, %61 : vector<8x128xi1>, vector<8x128xf32>
    %73 = arith.addi %2, %5 : i32
    %c6_i32 = arith.constant 6 : i32
    %74 = arith.addi %73, %c6_i32 : i32
    %75 = arith.index_cast %74 : i32 to index
    %76 = memref.load %arg2[%75] : memref<16xi32, #tpu.memory_space<smem>>
    %77 = arith.index_cast %76 : i32 to index
    %c0_14 = arith.constant 0 : index
    %78 = vector.load %arg3[%77, %c0_14] : memref<64x128xf32, #tpu.memory_space<vmem>>, vector<1x128xf32>
    %c6_i32_15 = arith.constant 6 : i32
    %79 = vector.broadcast %c6_i32_15 : i32 to vector<8x128xi32>
    %80 = arith.cmpi eq, %3, %79 : vector<8x128xi32>
    %81 = vector.shape_cast %78 : vector<1x128xf32> to vector<1x128xf32>
    %82 = vector.broadcast %81 : vector<1x128xf32> to vector<8x128xf32>
    %83 = arith.select %80, %82, %72 : vector<8x128xi1>, vector<8x128xf32>
    %84 = arith.addi %2, %5 : i32
    %c7_i32 = arith.constant 7 : i32
    %85 = arith.addi %84, %c7_i32 : i32
    %86 = arith.index_cast %85 : i32 to index
    %87 = memref.load %arg2[%86] : memref<16xi32, #tpu.memory_space<smem>>
    %88 = arith.index_cast %87 : i32 to index
    %c0_16 = arith.constant 0 : index
    %89 = vector.load %arg3[%88, %c0_16] : memref<64x128xf32, #tpu.memory_space<vmem>>, vector<1x128xf32>
    %c7_i32_17 = arith.constant 7 : i32
    %90 = vector.broadcast %c7_i32_17 : i32 to vector<8x128xi32>
    %91 = arith.cmpi eq, %3, %90 : vector<8x128xi32>
    %92 = vector.shape_cast %89 : vector<1x128xf32> to vector<1x128xf32>
    %93 = vector.broadcast %92 : vector<1x128xf32> to vector<8x128xf32>
    %94 = arith.select %91, %93, %83 : vector<8x128xi1>, vector<8x128xf32>
    %95 = arith.index_cast %5 : i32 to index
    %c0_18 = arith.constant 0 : index
    %96 = vector.load %arg4[%95, %c0_18] : memref<8x128xf32, #tpu.memory_space<vmem>>, vector<8x128xf32>
    %97 = arith.addf %94, %96 : vector<8x128xf32>
    %c0_19 = arith.constant 0 : index
    %98 = arith.index_cast %5 : i32 to index
    %c0_20 = arith.constant 0 : index
    %99 = vector.load %arg5[%c0_19, %98, %c0_20] : memref<1x8x128xf32, #tpu.memory_space<vmem>>, vector<1x8x128xf32>
    %100 = vector.shape_cast %99 : vector<1x8x128xf32> to vector<8x128xf32>
    %101 = vector.shape_cast %97 : vector<8x128xf32> to vector<1x8x128xf32>
    tpu.vector_store %arg5[%c0_19, %98, %c0_20], %101 {strides = array<i32>} : memref<1x8x128xf32, #tpu.memory_space<vmem>>, vector<1x8x128xf32>,
    %c1_i32_21 = arith.constant 1 : i32
    return
  }
  func.func @transform_0(%arg0: i32, %arg1: i32, %arg2: memref<16xi32, #tpu.memory_space<smem>>) -> (i32, i32) {
    %c0_i32 = arith.constant 0 : i32
    %c0_i32_0 = arith.constant 0 : i32
    %c0_i32_1 = arith.constant 0 : i32
    return %c0_i32, %c0_i32_0 : i32, i32
  }
  func.func @transform_1(%arg0: i32, %arg1: i32, %arg2: memref<16xi32, #tpu.memory_space<smem>>) -> (i32, i32) {
    %c0_i32 = arith.constant 0 : i32
    %c0_i32_0 = arith.constant 0 : i32
    return %arg0, %c0_i32 : i32, i32
  }
  func.func @transform_2(%arg0: i32, %arg1: i32, %arg2: memref<16xi32, #tpu.memory_space<smem>>) -> (i32, i32, i32) {
    %c0_i32 = arith.constant 0 : i32
    %c0_i32_0 = arith.constant 0 : i32
    return %arg1, %arg0, %c0_i32 : i32, i32, i32
  }
}

module attributes {stable_mosaic.version = 11 : i64} {
  func.func @_embed_kernel(%arg0: i32, %arg1: i32, %arg2: memref<16xi32, #tpu.memory_space<smem>>, %arg3: memref<64x128xf32, #tpu.memory_space<vmem>>, %arg4: memref<8x128xf32, #tpu.memory_space<vmem>>, %arg5: memref<1x8x128xf32, #tpu.memory_space<vmem>>) attributes {dimension_semantics = [#tpu.dimension_semantics<parallel>, #tpu.dimension_semantics<parallel>], iteration_bounds = array<i64: 1, 2>, scalar_prefetch = 1 : i64, scratch_operands = 0 : i64, tpu.core_type = #tpu.core_type<tc>, window_params = [{pipeline_mode = #tpu.pipeline_mode<synchronous>, transform_indices = @transform_0, window_bounds = array<i64: 64, 128>}, {transform_indices = @transform_1, window_bounds = array<i64: 8, 128>}, {transform_indices = @transform_2, window_bounds = array<i64: 1, 8, 128>}]} {
    %c8_i32 = arith.constant 8 : i32
    %0 = arith.muli %arg1, %c8_i32 : i32
    %c8_i32_0 = arith.constant 8 : i32
    %1 = arith.muli %arg0, %c8_i32_0 : i32
    %2 = arith.addi %0, %1 : i32
    %3 = tpu.iota {dimensions = array<i32: 0>} : vector<8x128xi32>
    %c0_i32 = arith.constant 0 : i32
    %c8_i32_1 = arith.constant 8 : i32
    %4 = arith.muli %c0_i32, %c8_i32_1 : i32
    %5 = tpu.assume_multiple %4, 8 : i32
    %cst = arith.constant 0.000000e+00 : f32
    %6 = vector.broadcast %cst : f32 to vector<8x128xf32>
    %7 = arith.addi %2, %5 : i32
    %c0_i32_2 = arith.constant 0 : i32
    %8 = arith.addi %7, %c0_i32_2 : i32
    %9 = arith.index_cast %8 : i32 to index
    %10 = memref.load %arg2[%9] : memref<16xi32, #tpu.memory_space<smem>>
    %11 = arith.index_cast %10 : i32 to index
    %c0 = arith.constant 0 : index
    %12 = vector.load %arg3[%11, %c0] : memref<64x128xf32, #tpu.memory_space<vmem>>, vector<1x128xf32>
    %c0_i32_3 = arith.constant 0 : i32
    %13 = vector.broadcast %c0_i32_3 : i32 to vector<8x128xi32>
    %14 = arith.cmpi eq, %3, %13 : vector<8x128xi32>
    %15 = vector.shape_cast %12 : vector<1x128xf32> to vector<1x128xf32>
    %16 = vector.broadcast %15 : vector<1x128xf32> to vector<8x128xf32>
    %17 = arith.select %14, %16, %6 : vector<8x128xi1>, vector<8x128xf32>
    %18 = arith.addi %2, %5 : i32
    %c1_i32 = arith.constant 1 : i32
    %19 = arith.addi %18, %c1_i32 : i32
    %20 = arith.index_cast %19 : i32 to index
    %21 = memref.load %arg2[%20] : memref<16xi32, #tpu.memory_space<smem>>
    %22 = arith.index_cast %21 : i32 to index
    %c0_4 = arith.constant 0 : index
    %23 = vector.load %arg3[%22, %c0_4] : memref<64x128xf32, #tpu.memory_space<vmem>>, vector<1x128xf32>
    %c1_i32_5 = arith.constant 1 : i32
    %24 = vector.broadcast %c1_i32_5 : i32 to vector<8x128xi32>
    %25 = arith.cmpi eq, %3, %24 : vector<8x128xi32>
    %26 = vector.shape_cast %23 : vector<1x128xf32> to vector<1x128xf32>
    %27 = vector.broadcast %26 : vector<1x128xf32> to vector<8x128xf32>
    %28 = arith.select %25, %27, %17 : vector<8x128xi1>, vector<8x128xf32>
    %29 = arith.addi %2, %5 : i32
    %c2_i32 = arith.constant 2 : i32
    %30 = arith.addi %29, %c2_i32 : i32
    %31 = arith.index_cast %30 : i32 to index
    %32 = memref.load %arg2[%31] : memref<16xi32, #tpu.memory_space<smem>>
    %33 = arith.index_cast %32 : i32 to index
    %c0_6 = arith.constant 0 : index
    %34 = vector.load %arg3[%33, %c0_6] : memref<64x128xf32, #tpu.memory_space<vmem>>, vector<1x128xf32>
    %c2_i32_7 = arith.constant 2 : i32
    %35 = vector.broadcast %c2_i32_7 : i32 to vector<8x128xi32>
    %36 = arith.cmpi eq, %3, %35 : vector<8x128xi32>
    %37 = vector.shape_cast %34 : vector<1x128xf32> to vector<1x128xf32>
    %38 = vector.broadcast %37 : vector<1x128xf32> to vector<8x128xf32>
    %39 = arith.select %36, %38, %28 : vector<8x128xi1>, vector<8x128xf32>
    %40 = arith.addi %2, %5 : i32
    %c3_i32 = arith.constant 3 : i32
    %41 = arith.addi %40, %c3_i32 : i32
    %42 = arith.index_cast %41 : i32 to index
    %43 = memref.load %arg2[%42] : memref<16xi32, #tpu.memory_space<smem>>
    %44 = arith.index_cast %43 : i32 to index
    %c0_8 = arith.constant 0 : index
    %45 = vector.load %arg3[%44, %c0_8] : memref<64x128xf32, #tpu.memory_space<vmem>>, vector<1x128xf32>
    %c3_i32_9 = arith.constant 3 : i32
    %46 = vector.broadcast %c3_i32_9 : i32 to vector<8x128xi32>
    %47 = arith.cmpi eq, %3, %46 : vector<8x128xi32>
    %48 = vector.shape_cast %45 : vector<1x128xf32> to vector<1x128xf32>
    %49 = vector.broadcast %48 : vector<1x128xf32> to vector<8x128xf32>
    %50 = arith.select %47, %49, %39 : vector<8x128xi1>, vector<8x128xf32>
    %51 = arith.addi %2, %5 : i32
    %c4_i32 = arith.constant 4 : i32
    %52 = arith.addi %51, %c4_i32 : i32
    %53 = arith.index_cast %52 : i32 to index
    %54 = memref.load %arg2[%53] : memref<16xi32, #tpu.memory_space<smem>>
    %55 = arith.index_cast %54 : i32 to index
    %c0_10 = arith.constant 0 : index
    %56 = vector.load %arg3[%55, %c0_10] : memref<64x128xf32, #tpu.memory_space<vmem>>, vector<1x128xf32>
    %c4_i32_11 = arith.constant 4 : i32
    %57 = vector.broadcast %c4_i32_11 : i32 to vector<8x128xi32>
    %58 = arith.cmpi eq, %3, %57 : vector<8x128xi32>
    %59 = vector.shape_cast %56 : vector<1x128xf32> to vector<1x128xf32>
    %60 = vector.broadcast %59 : vector<1x128xf32> to vector<8x128xf32>
    %61 = arith.select %58, %60, %50 : vector<8x128xi1>, vector<8x128xf32>
    %62 = arith.addi %2, %5 : i32
    %c5_i32 = arith.constant 5 : i32
    %63 = arith.addi %62, %c5_i32 : i32
    %64 = arith.index_cast %63 : i32 to index
    %65 = memref.load %arg2[%64] : memref<16xi32, #tpu.memory_space<smem>>
    %66 = arith.index_cast %65 : i32 to index
    %c0_12 = arith.constant 0 : index
    %67 = vector.load %arg3[%66, %c0_12] : memref<64x128xf32, #tpu.memory_space<vmem>>, vector<1x128xf32>
    %c5_i32_13 = arith.constant 5 : i32
    %68 = vector.broadcast %c5_i32_13 : i32 to vector<8x128xi32>
    %69 = arith.cmpi eq, %3, %68 : vector<8x128xi32>
    %70 = vector.shape_cast %67 : vector<1x128xf32> to vector<1x128xf32>
    %71 = vector.broadcast %70 : vector<1x128xf32> to vector<8x128xf32>
    %72 = arith.select %69, %71, %61 : vector<8x128xi1>, vector<8x128xf32>
    %73 = arith.addi %2, %5 : i32
    %c6_i32 = arith.constant 6 : i32
    %74 = arith.addi %73, %c6_i32 : i32
    %75 = arith.index_cast %74 : i32 to index
    %76 = memref.load %arg2[%75] : memref<16xi32, #tpu.memory_space<smem>>
    %77 = arith.index_cast %76 : i32 to index
    %c0_14 = arith.constant 0 : index
    %78 = vector.load %arg3[%77, %c0_14] : memref<64x128xf32, #tpu.memory_space<vmem>>, vector<1x128xf32>
    %c6_i32_15 = arith.constant 6 : i32
    %79 = vector.broadcast %c6_i32_15 : i32 to vector<8x128xi32>
    %80 = arith.cmpi eq, %3, %79 : vector<8x128xi32>
    %81 = vector.shape_cast %78 : vector<1x128xf32> to vector<1x128xf32>
    %82 = vector.broadcast %81 : vector<1x128xf32> to vector<8x128xf32>
    %83 = arith.select %80, %82, %72 : vector<8x128xi1>, vector<8x128xf32>
    %84 = arith.addi %2, %5 : i32
    %c7_i32 = arith.constant 7 : i32
    %85 = arith.addi %84, %c7_i32 : i32
    %86 = arith.index_cast %85 : i32 to index
    %87 = memref.load %arg2[%86] : memref<16xi32, #tpu.memory_space<smem>>
    %88 = arith.index_cast %87 : i32 to index
    %c0_16 = arith.constant 0 : index
    %89 = vector.load %arg3[%88, %c0_16] : memref<64x128xf32, #tpu.memory_space<vmem>>, vector<1x128xf32>
    %c7_i32_17 = arith.constant 7 : i32
    %90 = vector.broadcast %c7_i32_17 : i32 to vector<8x128xi32>
    %91 = arith.cmpi eq, %3, %90 : vector<8x128xi32>
    %92 = vector.shape_cast %89 : vector<1x128xf32> to vector<1x128xf32>
    %93 = vector.broadcast %92 : vector<1x128xf32> to vector<8x128xf32>
    %94 = arith.select %91, %93, %83 : vector<8x128xi1>, vector<8x128xf32>
    %95 = arith.index_cast %5 : i32 to index
    %c0_18 = arith.constant 0 : index
    %96 = vector.load %arg4[%95, %c0_18] : memref<8x128xf32, #tpu.memory_space<vmem>>, vector<8x128xf32>
    %97 = arith.addf %94, %96 : vector<8x128xf32>
    %c0_19 = arith.constant 0 : index
    %98 = arith.index_cast %5 : i32 to index
    %c0_20 = arith.constant 0 : index
    %99 = vector.load %arg5[%c0_19, %98, %c0_20] : memref<1x8x128xf32, #tpu.memory_space<vmem>>, vector<1x8x128xf32>
    %100 = vector.shape_cast %99 : vector<1x8x128xf32> to vector<8x128xf32>
    %101 = vector.shape_cast %97 : vector<8x128xf32> to vector<1x8x128xf32>
    tpu.vector_store %arg5[%c0_19, %98, %c0_20], %101 {strides = array<i32>} : memref<1x8x128xf32, #tpu.memory_space<vmem>>, vector<1x8x128xf32>,
    %c1_i32_21 = arith.constant 1 : i32
    return
  }
  func.func @transform_0(%arg0: i32, %arg1: i32, %arg2: memref<16xi32, #tpu.memory_space<smem>>) -> (i32, i32) {
    %c0_i32 = arith.constant 0 : i32
    %c0_i32_0 = arith.constant 0 : i32
    %c0_i32_1 = arith.constant 0 : i32
    return %c0_i32, %c0_i32_0 : i32, i32
  }
  func.func @transform_1(%arg0: i32, %arg1: i32, %arg2: memref<16xi32, #tpu.memory_space<smem>>) -> (i32, i32) {
    %c0_i32 = arith.constant 0 : i32
    %c0_i32_0 = arith.constant 0 : i32
    return %arg0, %c0_i32 : i32, i32
  }
  func.func @transform_2(%arg0: i32, %arg1: i32, %arg2: memref<16xi32, #tpu.memory_space<smem>>) -> (i32, i32, i32) {
    %c0_i32 = arith.constant 0 : i32
    %c0_i32_0 = arith.constant 0 : i32
    return %arg1, %arg0, %c0_i32 : i32, i32, i32
  }
}

</mosaic_0001>

<llo_original>
// kernel: tpu_custom_call.1
$region0: #{tpu_custom_call.1}
  #allocation0 [shape = 'u32[]', space=smem, size = 0x4, offset = 0x4, fixed_abs, tag = 'smem constant byte address 0x4 - core index']
  #allocation1 [shape = 'u32[144,128]{1,0:T(1,128)}', space=vmem, size = 0x12000, scoped, tag = 'internal scratch']
  #allocation2 [shape = 's32[1]{0}', space=sflag, size = 0x4, scoped, tag = 'scoped memory for tpu_custom_call.1']
  #allocation3 [shape = 'u8[512]{0}', space=smem, size = 0x200, scoped, tag = 'prefetched SMEM operand 0']
  %s0 = inlined_call_operand.hbm [shape: s32[16], index: 0, kind: input, shape index: {}]
  %s1 = inlined_call_operand.hbm [shape: f32[64,128], index: 1, kind: input, shape index: {}]
  %s2 = inlined_call_operand.hbm [shape: f32[8,128], index: 2, kind: input, shape index: {}]
  %s3 = inlined_call_operand.hbm [shape: f32[2,8,128], index: 3, kind: output, shape index: {}]
  %s4 = sld [smem:[#allocation0]]
  $region49: #{tpu_custom_call.1} parent=0
    _
  %s6 = ssub.s32 1, %s4
  %s7 = scalar_select 0, %s6, %s4
  %9 = dma.hbm_to_smem %s0, 16, [#allocation3], [#allocation2]
  %10 = dma.done [#allocation2], 16
  %11 = sfence
  $region1: #{tpu_custom_call.1} parent=0
    #allocation4 [shape = 'u8[32768]{0}', space=vmem, size = 0x8000, scoped, tag = 'input window, operand 1, single buffered']
    #allocation5 [shape = 's32[2]{0}', space=sflag, size = 0x8, scoped, tag = 'scoped memory for tpu_custom_call.1']
    #allocation6 [shape = 's32[2]{0}', space=sflag, size = 0x8, scoped, tag = 'scoped memory for tpu_custom_call.1']
    #allocation7 [shape = 'u8[4096]{0}', space=vmem, size = 0x1000, scoped, tag = 'input window, operand 2, single buffered']
    #allocation8 [shape = 's32[1]{0}', space=sflag, size = 0x4, scoped, tag = 'scoped memory for tpu_custom_call.1']
    #allocation9 [shape = 'u8[8192]{0}', space=vmem, size = 0x2000, scoped, tag = 'output window, operand 0']
    %12 = vsyncpa [#allocation5], 0
    %13 = vsyncpa [#allocation8], 0
    %14 = vsyncpa [#allocation6], 0
    %s15 = scalar_lea.sflag [#allocation6], 1
    %16 = vsyncpa %s15, 0
    loop: start=0, step=1, limit=4
    $region2: #{tpu_custom_call.1} parent=1 // loop_pre_header
      _
    $region3: #{tpu_custom_call.1} parent=1 // loop_header
      %s18 = sphi 0, %s22
      %p19 = scmp.ge.s32.totalorder %s18, 4
      %s25 = sphi 0, %s37
      %s26 = sphi 0, %s33
      %s27 = sphi 0, %s25
      %s28 = sphi 0, %s26
      %s29 = sphi 0, %s27
      %s30 = sphi 0, %s28
      %s38 = sphi 0, %s38
      %s40 = sphi 0, %s38
      %s41 = sphi 0, %s40
      %s55 = sphi 0, %s41
      %s61 = sphi 0, %s63
      %s64 = sphi 0, %s61
      %s65 = sphi 0, %s64
      %s81 = sphi 0, %s65
      %s89 = sphi 0, %s91
      %s92 = sphi 0, %s89
      %s93 = sphi 0, %s92
      %s109 = sphi 0, %s93
    $region4: #{tpu_custom_call.1} parent=1 // loop_header_branch
      %21 = sbr.rel (%p19) target = $region8
    $region5: #{tpu_custom_call.1} parent=1 // loop_body
      %s23 = ssub.s32 %s18, 1
      %s24 = ssub.s32 %s18, 2
      %s31 = sadd.s32 1, %s26
      %p32 = scmp.ge.s32.totalorder %s31, 2
      %s33 = scalar_select %p32, 0, %s31
      %s34 = sadd.s32 1, %s25
      %s35 = scalar_select %p32, %s34, %s25
      %p36 = scmp.ge.s32.totalorder %s35, 1
      %s37 = scalar_select %p36, 0, %s35
      %s39 = sadd.s32 %s38, 1
      %p42 = scmp.eq.s32.totalorder %s18, 1
      %p43 = scmp.ne.s32.totalorder %s38, %s40
      %p44 = scmp.eq.s32.totalorder %s18, 0
      %p45 = por %p43, %p44
      %p46 = scmp.ne.s32.totalorder %s38, %s40
      %p47 = scmp.eq.s32.totalorder %s23, 1
      %p48 = por %p46, %p47
      %p49 = scmp.ne.s32.totalorder %s40, %s41
      %p50 = scmp.eq.s32.totalorder %s23, 0
      %p51 = por %p49, %p50
      %p52 = scmp.ne.s32.totalorder %s40, %s41
      %p53 = scmp.eq.s32.totalorder %s24, 1
      %p54 = por %p52, %p53
      %p56 = scmp.ne.s32.totalorder %s41, %s55
      %p57 = scmp.eq.s32.totalorder %s24, 0
      %p58 = por %p56, %p57
      %s59 = ssub.s32 %s25, %s37
      %p60 = scmp.eq.s32.totalorder %s59, 0
      %s62 = sadd.s32 %s61, 1
      %s63 = scalar_select %p60, %s61, %s62
      %p66 = pneg %p60
      %p67 = scmp.eq.s32.totalorder %s18, 1
      %p68 = por %p66, %p67
      %p69 = scmp.ne.s32.totalorder %s61, %s64
      %p70 = scmp.eq.s32.totalorder %s18, 0
      %p71 = por %p69, %p70
      %p72 = scmp.ne.s32.totalorder %s61, %s64
      %p73 = scmp.eq.s32.totalorder %s23, 1
      %p74 = por %p72, %p73
      %p75 = scmp.ne.s32.totalorder %s64, %s65
      %p76 = scmp.eq.s32.totalorder %s23, 0
      %p77 = por %p75, %p76
      %p78 = scmp.ne.s32.totalorder %s64, %s65
      %p79 = scmp.eq.s32.totalorder %s24, 1
      %p80 = por %p78, %p79
      %p82 = scmp.ne.s32.totalorder %s65, %s81
      %p83 = scmp.eq.s32.totalorder %s24, 0
      %p84 = por %p82, %p83
      %s85 = ssub.s32 %s26, %s33
      %s86 = ssub.s32 %s25, %s37
      %s87 = sor.u32 %s85, %s86
      %p88 = scmp.eq.s32.totalorder %s87, 0
      %s90 = sadd.s32 %s89, 1
      %s91 = scalar_select %p88, %s89, %s90
      %p94 = pneg %p88
      %p95 = scmp.eq.s32.totalorder %s18, 1
      %p96 = por %p94, %p95
      %p97 = scmp.ne.s32.totalorder %s89, %s92
      %p98 = scmp.eq.s32.totalorder %s18, 0
      %p99 = por %p97, %p98
      %p100 = scmp.ne.s32.totalorder %s89, %s92
      %p101 = scmp.eq.s32.totalorder %s23, 1
      %p102 = por %p100, %p101
      %p103 = scmp.ne.s32.totalorder %s92, %s93
      %p104 = scmp.eq.s32.totalorder %s23, 0
      %p105 = por %p103, %p104
      %p106 = scmp.ne.s32.totalorder %s92, %s93
      %p107 = scmp.eq.s32.totalorder %s24, 1
      %p108 = por %p106, %p107
      %p110 = scmp.ne.s32.totalorder %s93, %s109
      %p111 = scmp.eq.s32.totalorder %s24, 0
      %p112 = por %p110, %p111
      %p113 = scmp.le.s32.totalorder 1, %s18
      %p114 = scmp.lt.s32.totalorder %s18, 3
      %p115 = pnand %p113, %p114
      %p116 = pneg %p115
      // Predicated region
      $region9: #{tpu_custom_call.1} parent=5 // pred_check
        _
      $region10: #{tpu_custom_call.1} parent=5 // pred_check_branch
        %118 = sbr.rel (%p115) target = $region12
      $region11: #{tpu_custom_call.1} parent=5 // pred_region
        %s119 = ssub.s32 %s18, 1
        // Predicated region
        $region13: #{tpu_custom_call.1} parent=11 // pred_check
          %p120 = pneg %p51
        $region14: #{tpu_custom_call.1} parent=11 // pred_check_branch
          %122 = sbr.rel (%p120) target = $region16
        $region15: #{tpu_custom_call.1} parent=11 // pred_region
          %s124 = ssub.s32 1024, 1024
          %125 = vsyncadd [#allocation5], %s124
          %s126 = sshll.u32 [#allocation4], 4
          %s127 = int_to_ptr.vmem [resolvable:$true] %s126
          %132 = dma.hbm_to_vmem [thread:$0]  %s1, 1024, %s127, [#allocation5], 128, 128, 8
        $region16: #{tpu_custom_call.1} parent=11 // pred_fallthru
          _
        // Predicated region
        $region17: #{tpu_custom_call.1} parent=11 // pred_check
          %p133 = pneg %p77
        $region18: #{tpu_custom_call.1} parent=11 // pred_check_branch
          %135 = sbr.rel (%p133) target = $region20
        $region19: #{tpu_custom_call.1} parent=11 // pred_region
          %s137 = ssub.s32 128, 128
          %138 = vsyncadd [#allocation8], %s137
          %s139 = smul.addr %s27, 128
          %s140 = scalar_lea.hbm %s2, %s139
          %s142 = sshll.u32 [#allocation7], 4
          %s143 = int_to_ptr.vmem [resolvable:$true] %s142
          %145 = dma.hbm_to_vmem [thread:$0]  %s140, 128, %s143, [#allocation8]
        $region20: #{tpu_custom_call.1} parent=11 // pred_fallthru
          _
      $region12: #{tpu_custom_call.1} parent=5 // pred_fallthru
        _
      %p146 = scmp.lt.s32.totalorder %s18, 2
      // Predicated region
      $region21: #{tpu_custom_call.1} parent=5 // pred_check
        %p147 = pneg %p146
      $region22: #{tpu_custom_call.1} parent=5 // pred_check_branch
        %149 = sbr.rel (%p147) target = $region24
      $region23: #{tpu_custom_call.1} parent=5 // pred_region
        _
      $region24: #{tpu_custom_call.1} parent=5 // pred_fallthru
        _
      %p150 = scmp.le.s32.totalorder 1, %s18
      %p151 = scmp.lt.s32.totalorder %s18, 3
      %p152 = pnand %p150, %p151
      %p153 = pneg %p152
      // Predicated region
      $region25: #{tpu_custom_call.1} parent=5 // pred_check
        _
      $region26: #{tpu_custom_call.1} parent=5 // pred_check_branch
        %155 = sbr.rel (%p152) target = $region28
      $region27: #{tpu_custom_call.1} parent=5 // pred_region
        %s156 = ssub.s32 %s18, 1
        // Predicated region
        $region29: #{tpu_custom_call.1} parent=27 // pred_check
          %p157 = pneg %p51
        $region30: #{tpu_custom_call.1} parent=27 // pred_check_branch
          %159 = sbr.rel (%p157) target = $region32
        $region31: #{tpu_custom_call.1} parent=27 // pred_region
          %160 = dma.done [#allocation5], 1024
        $region32: #{tpu_custom_call.1} parent=27 // pred_fallthru
          _
        // Predicated region
        $region33: #{tpu_custom_call.1} parent=27 // pred_check
          %p161 = pneg %p77
        $region34: #{tpu_custom_call.1} parent=27 // pred_check_branch
          %163 = sbr.rel (%p161) target = $region36
        $region35: #{tpu_custom_call.1} parent=27 // pred_region
          %164 = dma.done [#allocation8], 128
        $region36: #{tpu_custom_call.1} parent=27 // pred_fallthru
          _
        %p165 = pneg %p51
        %p166 = pneg %p48
        %p167 = pneg %p77
        %p168 = pneg %p74
        %p169 = pneg %p105
        %p170 = pneg %p102
        %s171 = sand.u32 %s92, 1
        %s172 = scalar_lea.sflag [#allocation6], %s171
        %s173 = sand.u32 %s92, 1
        %s174 = smul.addr %s173, 8
        %s175 = scalar_lea.vmem [#allocation9], %s174
        %s176 = smul.u32 %s28, 8
        %s177 = smul.u32 %s27, 8
        %s178 = sadd.s32 %s176, %s177
        %v179 = vlaneseq
        %v180 = vshrl.u32 %v179, 7
        %s181 = sadd.s32 %s178, 0
        %s182 = sld [smem:[#allocation3 + %s181]]
        %s183 = scalar_lea.vmem [#allocation4], %s182
        %v184 = vld [vmem:[%s183] sm:$0x1]
        %vm185 = vcmp.eq.s32.totalorder %v180, 0
        %v186 = vlaneseq
        %v187 = vshrl.u32 %v186, 7
        %v188 = vsub.s32 0, %v187
        %v189 = vrot.slane %v184, %v188
        %v190 = vsel %vm185, %v189, 0.0
        %s191 = sadd.s32 %s181, 1
        %s192 = sld [smem:[#allocation3 + %s191]]
        %s193 = scalar_lea.vmem [#allocation4], %s192
        %v194 = vld [vmem:[%s193] sm:$0x1]
        %vm195 = vcmp.eq.s32.totalorder %v180, 1
        %v196 = vlaneseq
        %v197 = vshrl.u32 %v196, 7
        %v198 = vsub.s32 0, %v197
        %v199 = vrot.slane %v194, %v198
        %v200 = vsel %vm195, %v199, %v190
        %s201 = sadd.s32 %s181, 2
        %s202 = sld [smem:[#allocation3 + %s201]]
        %s203 = scalar_lea.vmem [#allocation4], %s202
        %v204 = vld [vmem:[%s203] sm:$0x1]
        %vm205 = vcmp.eq.s32.totalorder %v180, 2
        %v206 = vlaneseq
        %v207 = vshrl.u32 %v206, 7
        %v208 = vsub.s32 0, %v207
        %v209 = vrot.slane %v204, %v208
        %v210 = vsel %vm205, %v209, %v200
        %s211 = sadd.s32 %s181, 3
        %s212 = sld [smem:[#allocation3 + %s211]]
        %s213 = scalar_lea.vmem [#allocation4], %s212
        %v214 = vld [vmem:[%s213] sm:$0x1]
        %vm215 = vcmp.eq.s32.totalorder %v180, 3
        %v216 = vlaneseq
        %v217 = vshrl.u32 %v216, 7
        %v218 = vsub.s32 0, %v217
        %v219 = vrot.slane %v214, %v218
        %v220 = vsel %vm215, %v219, %v210
        %s221 = sadd.s32 %s181, 4
        %s222 = sld [smem:[#allocation3 + %s221]]
        %s223 = scalar_lea.vmem [#allocation4], %s222
        %v224 = vld [vmem:[%s223] sm:$0x1]
        %vm225 = vcmp.eq.s32.totalorder %v180, 4
        %v226 = vlaneseq
        %v227 = vshrl.u32 %v226, 7
        %v228 = vsub.s32 0, %v227
        %v229 = vrot.slane %v224, %v228
        %v230 = vsel %vm225, %v229, %v220
        %s231 = sadd.s32 %s181, 5
        %s232 = sld [smem:[#allocation3 + %s231]]
        %s233 = scalar_lea.vmem [#allocation4], %s232
        %v234 = vld [vmem:[%s233] sm:$0x1]
        %vm235 = vcmp.eq.s32.totalorder %v180, 5
        %v236 = vlaneseq
        %v237 = vshrl.u32 %v236, 7
        %v238 = vsub.s32 0, %v237
        %v239 = vrot.slane %v234, %v238
        %v240 = vsel %vm235, %v239, %v230
        %s241 = sadd.s32 %s181, 6
        %s242 = sld [smem:[#allocation3 + %s241]]
        %s243 = scalar_lea.vmem [#allocation4], %s242
        %v244 = vld [vmem:[%s243] sm:$0x1]
        %vm245 = vcmp.eq.s32.totalorder %v180, 6
        %v246 = vlaneseq
        %v247 = vshrl.u32 %v246, 7
        %v248 = vsub.s32 0, %v247
        %v249 = vrot.slane %v244, %v248
        %v250 = vsel %vm245, %v249, %v240
        %s251 = sadd.s32 %s181, 7
        %s252 = sld [smem:[#allocation3 + %s251]]
        %s253 = scalar_lea.vmem [#allocation4], %s252
        %v254 = vld [vmem:[%s253] sm:$0x1]
        %vm255 = vcmp.eq.s32.totalorder %v180, 7
        %v256 = vlaneseq
        %v257 = vshrl.u32 %v256, 7
        %v258 = vsub.s32 0, %v257
        %v259 = vrot.slane %v254, %v258
        %v260 = vsel %vm255, %v259, %v250
        %v261 = vld [vmem:[#allocation7] sm:$0xff]
        %v262 = vadd.f32 %v260, %v261
        %263 = vst [vmem:[%s175] sm:$0xff] %v262
        %s264 = sand.u32 %s92, 1
        %s265 = scalar_lea.sflag [#allocation6], %s264
        %s266 = sand.u32 %s92, 1
        %s267 = smul.addr %s266, 8
        %s268 = scalar_lea.vmem [#allocation9], %s267
        // Predicated region
        $region37: #{tpu_custom_call.1} parent=27 // pred_check
          %p269 = pneg %p102
        $region38: #{tpu_custom_call.1} parent=27 // pred_check_branch
          %271 = sbr.rel (%p269) target = $region40
        $region39: #{tpu_custom_call.1} parent=27 // pred_region
          %s273 = ssub.s32 128, 128
          %274 = vsyncadd %s265, %s273
          %s275 = sadd.s32 %s27, %s28
          %s276 = smul.addr %s275, 128
          %s277 = scalar_lea.hbm %s3, %s276
          %s279 = sshll.u32 %s268, 4
          %s280 = int_to_ptr.vmem [resolvable:$true] %s279
          %282 = dma.vmem_to_hbm [thread:$0]  %s280, 128, %s277, %s265
        $region40: #{tpu_custom_call.1} parent=27 // pred_fallthru
          _
      $region28: #{tpu_custom_call.1} parent=5 // pred_fallthru
        _
      %p283 = scmp.le.s32.totalorder 2, %s18
      // Predicated region
      $region41: #{tpu_custom_call.1} parent=5 // pred_check
        %p284 = pneg %p283
      $region42: #{tpu_custom_call.1} parent=5 // pred_check_branch
        %286 = sbr.rel (%p284) target = $region44
      $region43: #{tpu_custom_call.1} parent=5 // pred_region
        %s287 = ssub.s32 %s18, 2
        // Predicated region
        $region45: #{tpu_custom_call.1} parent=43 // pred_check
          %p288 = pneg %p108
        $region46: #{tpu_custom_call.1} parent=43 // pred_check_branch
          %290 = sbr.rel (%p288) target = $region48
        $region47: #{tpu_custom_call.1} parent=43 // pred_region
          %s291 = sand.u32 %s93, 1
          %s292 = scalar_lea.sflag [#allocation6], %s291
          %s293 = sand.u32 %s93, 1
          %s294 = smul.addr %s293, 8
          %s295 = scalar_lea.vmem [#allocation9], %s294
          %296 = dma.done %s292, 128
        $region48: #{tpu_custom_call.1} parent=43 // pred_fallthru
          _
      $region44: #{tpu_custom_call.1} parent=5 // pred_fallthru
        _
    $region6: #{tpu_custom_call.1} parent=1 // loop_footer
      %s22 = sadd.s32 1, %s18
    $region7: #{tpu_custom_call.1} parent=1 // loop_footer_branch
      %17 = sbr.rel target = $region3
    $region8: #{tpu_custom_call.1} parent=1 // loop_exit
      _
    %297 = vsyncpa [#allocation5], 1
    %s298 = scalar_lea.sflag [#allocation5], 1
    %299 = vsyncpa %s298, 1
    %300 = vsyncpa [#allocation8], 1
    %301 = vsyncpa [#allocation6], 1
    %s302 = scalar_lea.sflag [#allocation6], 1
    %303 = vsyncpa %s302, 1

// kernel: tpu_custom_call.1
$region0: #{tpu_custom_call.1}
  #allocation0 [shape = 'u32[]', space=smem, size = 0x4, offset = 0x4, fixed_abs, tag = 'smem constant byte address 0x4 - core index']
  #allocation1 [shape = 'u32[144,128]{1,0:T(1,128)}', space=vmem, size = 0x12000, scoped, tag = 'internal scratch']
  #allocation2 [shape = 's32[1]{0}', space=sflag, size = 0x4, scoped, tag = 'scoped memory for tpu_custom_call.1']
  #allocation3 [shape = 'u8[512]{0}', space=smem, size = 0x200, scoped, tag = 'prefetched SMEM operand 0']
  %s0 = inlined_call_operand.hbm [shape: s32[16], index: 0, kind: input, shape index: {}]
  %s1 = inlined_call_operand.hbm [shape: f32[64,128], index: 1, kind: input, shape index: {}]
  %s2 = inlined_call_operand.hbm [shape: f32[8,128], index: 2, kind: input, shape index: {}]
  %s3 = inlined_call_operand.hbm [shape: f32[2,8,128], index: 3, kind: output, shape index: {}]
  %s4 = sld [smem:[#allocation0]]
  $region49: #{tpu_custom_call.1} parent=0
    _
  %s6 = ssub.s32 1, %s4
  %s7 = scalar_select 0, %s6, %s4
  %9 = dma.hbm_to_smem %s0, 16, [#allocation3], [#allocation2]
  %10 = dma.done [#allocation2], 16
  %11 = sfence
  $region1: #{tpu_custom_call.1} parent=0
    #allocation4 [shape = 'u8[32768]{0}', space=vmem, size = 0x8000, scoped, tag = 'input window, operand 1, single buffered']
    #allocation5 [shape = 's32[2]{0}', space=sflag, size = 0x8, scoped, tag = 'scoped memory for tpu_custom_call.1']
    #allocation6 [shape = 's32[2]{0}', space=sflag, size = 0x8, scoped, tag = 'scoped memory for tpu_custom_call.1']
    #allocation7 [shape = 'u8[4096]{0}', space=vmem, size = 0x1000, scoped, tag = 'input window, operand 2, single buffered']
    #allocation8 [shape = 's32[1]{0}', space=sflag, size = 0x4, scoped, tag = 'scoped memory for tpu_custom_call.1']
    #allocation9 [shape = 'u8[8192]{0}', space=vmem, size = 0x2000, scoped, tag = 'output window, operand 0']
    %12 = vsyncpa [#allocation5], 0
    %13 = vsyncpa [#allocation8], 0
    %14 = vsyncpa [#allocation6], 0
    %s15 = scalar_lea.sflag [#allocation6], 1
    %16 = vsyncpa %s15, 0
    loop: start=0, step=1, limit=4
    $region2: #{tpu_custom_call.1} parent=1 // loop_pre_header
      _
    $region3: #{tpu_custom_call.1} parent=1 // loop_header
      %s18 = sphi 0, %s22
      %p19 = scmp.ge.s32.totalorder %s18, 4
      %s25 = sphi 0, %s37
      %s26 = sphi 0, %s33
      %s27 = sphi 0, %s25
      %s28 = sphi 0, %s26
      %s29 = sphi 0, %s27
      %s30 = sphi 0, %s28
      %s38 = sphi 0, %s38
      %s40 = sphi 0, %s38
      %s41 = sphi 0, %s40
      %s55 = sphi 0, %s41
      %s61 = sphi 0, %s63
      %s64 = sphi 0, %s61
      %s65 = sphi 0, %s64
      %s81 = sphi 0, %s65
      %s89 = sphi 0, %s91
      %s92 = sphi 0, %s89
      %s93 = sphi 0, %s92
      %s109 = sphi 0, %s93
    $region4: #{tpu_custom_call.1} parent=1 // loop_header_branch
      %21 = sbr.rel (%p19) target = $region8
    $region5: #{tpu_custom_call.1} parent=1 // loop_body
      %s23 = ssub.s32 %s18, 1
      %s24 = ssub.s32 %s18, 2
      %s31 = sadd.s32 1, %s26
      %p32 = scmp.ge.s32.totalorder %s31, 2
      %s33 = scalar_select %p32, 0, %s31
      %s34 = sadd.s32 1, %s25
      %s35 = scalar_select %p32, %s34, %s25
      %p36 = scmp.ge.s32.totalorder %s35, 1
      %s37 = scalar_select %p36, 0, %s35
      %s39 = sadd.s32 %s38, 1
      %p42 = scmp.eq.s32.totalorder %s18, 1
      %p43 = scmp.ne.s32.totalorder %s38, %s40
      %p44 = scmp.eq.s32.totalorder %s18, 0
      %p45 = por %p43, %p44
      %p46 = scmp.ne.s32.totalorder %s38, %s40
      %p47 = scmp.eq.s32.totalorder %s23, 1
      %p48 = por %p46, %p47
      %p49 = scmp.ne.s32.totalorder %s40, %s41
      %p50 = scmp.eq.s32.totalorder %s23, 0
      %p51 = por %p49, %p50
      %p52 = scmp.ne.s32.totalorder %s40, %s41
      %p53 = scmp.eq.s32.totalorder %s24, 1
      %p54 = por %p52, %p53
      %p56 = scmp.ne.s32.totalorder %s41, %s55
      %p57 = scmp.eq.s32.totalorder %s24, 0
      %p58 = por %p56, %p57
      %s59 = ssub.s32 %s25, %s37
      %p60 = scmp.eq.s32.totalorder %s59, 0
      %s62 = sadd.s32 %s61, 1
      %s63 = scalar_select %p60, %s61, %s62
      %p66 = pneg %p60
      %p67 = scmp.eq.s32.totalorder %s18, 1
      %p68 = por %p66, %p67
      %p69 = scmp.ne.s32.totalorder %s61, %s64
      %p70 = scmp.eq.s32.totalorder %s18, 0
      %p71 = por %p69, %p70
      %p72 = scmp.ne.s32.totalorder %s61, %s64
      %p73 = scmp.eq.s32.totalorder %s23, 1
      %p74 = por %p72, %p73
      %p75 = scmp.ne.s32.totalorder %s64, %s65
      %p76 = scmp.eq.s32.totalorder %s23, 0
      %p77 = por %p75, %p76
      %p78 = scmp.ne.s32.totalorder %s64, %s65
      %p79 = scmp.eq.s32.totalorder %s24, 1
      %p80 = por %p78, %p79
      %p82 = scmp.ne.s32.totalorder %s65, %s81
      %p83 = scmp.eq.s32.totalorder %s24, 0
      %p84 = por %p82, %p83
      %s85 = ssub.s32 %s26, %s33
      %s86 = ssub.s32 %s25, %s37
      %s87 = sor.u32 %s85, %s86
      %p88 = scmp.eq.s32.totalorder %s87, 0
      %s90 = sadd.s32 %s89, 1
      %s91 = scalar_select %p88, %s89, %s90
      %p94 = pneg %p88
      %p95 = scmp.eq.s32.totalorder %s18, 1
      %p96 = por %p94, %p95
      %p97 = scmp.ne.s32.totalorder %s89, %s92
      %p98 = scmp.eq.s32.totalorder %s18, 0
      %p99 = por %p97, %p98
      %p100 = scmp.ne.s32.totalorder %s89, %s92
      %p101 = scmp.eq.s32.totalorder %s23, 1
      %p102 = por %p100, %p101
      %p103 = scmp.ne.s32.totalorder %s92, %s93
      %p104 = scmp.eq.s32.totalorder %s23, 0
      %p105 = por %p103, %p104
      %p106 = scmp.ne.s32.totalorder %s92, %s93
      %p107 = scmp.eq.s32.totalorder %s24, 1
      %p108 = por %p106, %p107
      %p110 = scmp.ne.s32.totalorder %s93, %s109
      %p111 = scmp.eq.s32.totalorder %s24, 0
      %p112 = por %p110, %p111
      %p113 = scmp.le.s32.totalorder 1, %s18
      %p114 = scmp.lt.s32.totalorder %s18, 3
      %p115 = pnand %p113, %p114
      %p116 = pneg %p115
      // Predicated region
      $region9: #{tpu_custom_call.1} parent=5 // pred_check
        _
      $region10: #{tpu_custom_call.1} parent=5 // pred_check_branch
        %118 = sbr.rel (%p115) target = $region12
      $region11: #{tpu_custom_call.1} parent=5 // pred_region
        %s119 = ssub.s32 %s18, 1
        // Predicated region
        $region13: #{tpu_custom_call.1} parent=11 // pred_check
          %p120 = pneg %p51
        $region14: #{tpu_custom_call.1} parent=11 // pred_check_branch
          %122 = sbr.rel (%p120) target = $region16
        $region15: #{tpu_custom_call.1} parent=11 // pred_region
          %s124 = ssub.s32 1024, 1024
          %125 = vsyncadd [#allocation5], %s124
          %s126 = sshll.u32 [#allocation4], 4
          %s127 = int_to_ptr.vmem [resolvable:$true] %s126
          %132 = dma.hbm_to_vmem [thread:$0]  %s1, 1024, %s127, [#allocation5], 128, 128, 8
        $region16: #{tpu_custom_call.1} parent=11 // pred_fallthru
          _
        // Predicated region
        $region17: #{tpu_custom_call.1} parent=11 // pred_check
          %p133 = pneg %p77
        $region18: #{tpu_custom_call.1} parent=11 // pred_check_branch
          %135 = sbr.rel (%p133) target = $region20
        $region19: #{tpu_custom_call.1} parent=11 // pred_region
          %s137 = ssub.s32 128, 128
          %138 = vsyncadd [#allocation8], %s137
          %s139 = smul.addr %s27, 128
          %s140 = scalar_lea.hbm %s2, %s139
          %s142 = sshll.u32 [#allocation7], 4
          %s143 = int_to_ptr.vmem [resolvable:$true] %s142
          %145 = dma.hbm_to_vmem [thread:$0]  %s140, 128, %s143, [#allocation8]
        $region20: #{tpu_custom_call.1} parent=11 // pred_fallthru
          _
      $region12: #{tpu_custom_call.1} parent=5 // pred_fallthru
        _
      %p146 = scmp.lt.s32.totalorder %s18, 2
      // Predicated region
      $region21: #{tpu_custom_call.1} parent=5 // pred_check
        %p147 = pneg %p146
      $region22: #{tpu_custom_call.1} parent=5 // pred_check_branch
        %149 = sbr.rel (%p147) target = $region24
      $region23: #{tpu_custom_call.1} parent=5 // pred_region
        _
      $region24: #{tpu_custom_call.1} parent=5 // pred_fallthru
        _
      %p150 = scmp.le.s32.totalorder 1, %s18
      %p151 = scmp.lt.s32.totalorder %s18, 3
      %p152 = pnand %p150, %p151
      %p153 = pneg %p152
      // Predicated region
      $region25: #{tpu_custom_call.1} parent=5 // pred_check
        _
      $region26: #{tpu_custom_call.1} parent=5 // pred_check_branch
        %155 = sbr.rel (%p152) target = $region28
      $region27: #{tpu_custom_call.1} parent=5 // pred_region
        %s156 = ssub.s32 %s18, 1
        // Predicated region
        $region29: #{tpu_custom_call.1} parent=27 // pred_check
          %p157 = pneg %p51
        $region30: #{tpu_custom_call.1} parent=27 // pred_check_branch
          %159 = sbr.rel (%p157) target = $region32
        $region31: #{tpu_custom_call.1} parent=27 // pred_region
          %160 = dma.done [#allocation5], 1024
        $region32: #{tpu_custom_call.1} parent=27 // pred_fallthru
          _
        // Predicated region
        $region33: #{tpu_custom_call.1} parent=27 // pred_check
          %p161 = pneg %p77
        $region34: #{tpu_custom_call.1} parent=27 // pred_check_branch
          %163 = sbr.rel (%p161) target = $region36
        $region35: #{tpu_custom_call.1} parent=27 // pred_region
          %164 = dma.done [#allocation8], 128
        $region36: #{tpu_custom_call.1} parent=27 // pred_fallthru
          _
        %p165 = pneg %p51
        %p166 = pneg %p48
        %p167 = pneg %p77
        %p168 = pneg %p74
        %p169 = pneg %p105
        %p170 = pneg %p102
        %s171 = sand.u32 %s92, 1
        %s172 = scalar_lea.sflag [#allocation6], %s171
        %s173 = sand.u32 %s92, 1
        %s174 = smul.addr %s173, 8
        %s175 = scalar_lea.vmem [#allocation9], %s174
        %s176 = smul.u32 %s28, 8
        %s177 = smul.u32 %s27, 8
        %s178 = sadd.s32 %s176, %s177
        %v179 = vlaneseq
        %v180 = vshrl.u32 %v179, 7
        %s181 = sadd.s32 %s178, 0
        %s182 = sld [smem:[#allocation3 + %s181]]
        %s183 = scalar_lea.vmem [#allocation4], %s182
        %v184 = vld [vmem:[%s183] sm:$0x1]
        %vm185 = vcmp.eq.s32.totalorder %v180, 0
        %v186 = vlaneseq
        %v187 = vshrl.u32 %v186, 7
        %v188 = vsub.s32 0, %v187
        %v189 = vrot.slane %v184, %v188
        %v190 = vsel %vm185, %v189, 0.0
        %s191 = sadd.s32 %s181, 1
        %s192 = sld [smem:[#allocation3 + %s191]]
        %s193 = scalar_lea.vmem [#allocation4], %s192
        %v194 = vld [vmem:[%s193] sm:$0x1]
        %vm195 = vcmp.eq.s32.totalorder %v180, 1
        %v196 = vlaneseq
        %v197 = vshrl.u32 %v196, 7
        %v198 = vsub.s32 0, %v197
        %v199 = vrot.slane %v194, %v198
        %v200 = vsel %vm195, %v199, %v190
        %s201 = sadd.s32 %s181, 2
        %s202 = sld [smem:[#allocation3 + %s201]]
        %s203 = scalar_lea.vmem [#allocation4], %s202
        %v204 = vld [vmem:[%s203] sm:$0x1]
        %vm205 = vcmp.eq.s32.totalorder %v180, 2
        %v206 = vlaneseq
        %v207 = vshrl.u32 %v206, 7
        %v208 = vsub.s32 0, %v207
        %v209 = vrot.slane %v204, %v208
        %v210 = vsel %vm205, %v209, %v200
        %s211 = sadd.s32 %s181, 3
        %s212 = sld [smem:[#allocation3 + %s211]]
        %s213 = scalar_lea.vmem [#allocation4], %s212
        %v214 = vld [vmem:[%s213] sm:$0x1]
        %vm215 = vcmp.eq.s32.totalorder %v180, 3
        %v216 = vlaneseq
        %v217 = vshrl.u32 %v216, 7
        %v218 = vsub.s32 0, %v217
        %v219 = vrot.slane %v214, %v218
        %v220 = vsel %vm215, %v219, %v210
        %s221 = sadd.s32 %s181, 4
        %s222 = sld [smem:[#allocation3 + %s221]]
        %s223 = scalar_lea.vmem [#allocation4], %s222
        %v224 = vld [vmem:[%s223] sm:$0x1]
        %vm225 = vcmp.eq.s32.totalorder %v180, 4
        %v226 = vlaneseq
        %v227 = vshrl.u32 %v226, 7
        %v228 = vsub.s32 0, %v227
        %v229 = vrot.slane %v224, %v228
        %v230 = vsel %vm225, %v229, %v220
        %s231 = sadd.s32 %s181, 5
        %s232 = sld [smem:[#allocation3 + %s231]]
        %s233 = scalar_lea.vmem [#allocation4], %s232
        %v234 = vld [vmem:[%s233] sm:$0x1]
        %vm235 = vcmp.eq.s32.totalorder %v180, 5
        %v236 = vlaneseq
        %v237 = vshrl.u32 %v236, 7
        %v238 = vsub.s32 0, %v237
        %v239 = vrot.slane %v234, %v238
        %v240 = vsel %vm235, %v239, %v230
        %s241 = sadd.s32 %s181, 6
        %s242 = sld [smem:[#allocation3 + %s241]]
        %s243 = scalar_lea.vmem [#allocation4], %s242
        %v244 = vld [vmem:[%s243] sm:$0x1]
        %vm245 = vcmp.eq.s32.totalorder %v180, 6
        %v246 = vlaneseq
        %v247 = vshrl.u32 %v246, 7
        %v248 = vsub.s32 0, %v247
        %v249 = vrot.slane %v244, %v248
        %v250 = vsel %vm245, %v249, %v240
        %s251 = sadd.s32 %s181, 7
        %s252 = sld [smem:[#allocation3 + %s251]]
        %s253 = scalar_lea.vmem [#allocation4], %s252
        %v254 = vld [vmem:[%s253] sm:$0x1]
        %vm255 = vcmp.eq.s32.totalorder %v180, 7
        %v256 = vlaneseq
        %v257 = vshrl.u32 %v256, 7
        %v258 = vsub.s32 0, %v257
        %v259 = vrot.slane %v254, %v258
        %v260 = vsel %vm255, %v259, %v250
        %v261 = vld [vmem:[#allocation7] sm:$0xff]
        %v262 = vadd.f32 %v260, %v261
        %263 = vst [vmem:[%s175] sm:$0xff] %v262
        %s264 = sand.u32 %s92, 1
        %s265 = scalar_lea.sflag [#allocation6], %s264
        %s266 = sand.u32 %s92, 1
        %s267 = smul.addr %s266, 8
        %s268 = scalar_lea.vmem [#allocation9], %s267
        // Predicated region
        $region37: #{tpu_custom_call.1} parent=27 // pred_check
          %p269 = pneg %p102
        $region38: #{tpu_custom_call.1} parent=27 // pred_check_branch
          %271 = sbr.rel (%p269) target = $region40
        $region39: #{tpu_custom_call.1} parent=27 // pred_region
          %s273 = ssub.s32 128, 128
          %274 = vsyncadd %s265, %s273
          %s275 = sadd.s32 %s27, %s28
          %s276 = smul.addr %s275, 128
          %s277 = scalar_lea.hbm %s3, %s276
          %s279 = sshll.u32 %s268, 4
          %s280 = int_to_ptr.vmem [resolvable:$true] %s279
          %282 = dma.vmem_to_hbm [thread:$0]  %s280, 128, %s277, %s265
        $region40: #{tpu_custom_call.1} parent=27 // pred_fallthru
          _
      $region28: #{tpu_custom_call.1} parent=5 // pred_fallthru
        _
      %p283 = scmp.le.s32.totalorder 2, %s18
      // Predicated region
      $region41: #{tpu_custom_call.1} parent=5 // pred_check
        %p284 = pneg %p283
      $region42: #{tpu_custom_call.1} parent=5 // pred_check_branch
        %286 = sbr.rel (%p284) target = $region44
      $region43: #{tpu_custom_call.1} parent=5 // pred_region
        %s287 = ssub.s32 %s18, 2
        // Predicated region
        $region45: #{tpu_custom_call.1} parent=43 // pred_check
          %p288 = pneg %p108
        $region46: #{tpu_custom_call.1} parent=43 // pred_check_branch
          %290 = sbr.rel (%p288) target = $region48
        $region47: #{tpu_custom_call.1} parent=43 // pred_region
          %s291 = sand.u32 %s93, 1
          %s292 = scalar_lea.sflag [#allocation6], %s291
          %s293 = sand.u32 %s93, 1
          %s294 = smul.addr %s293, 8
          %s295 = scalar_lea.vmem [#allocation9], %s294
          %296 = dma.done %s292, 128
        $region48: #{tpu_custom_call.1} parent=43 // pred_fallthru
          _
      $region44: #{tpu_custom_call.1} parent=5 // pred_fallthru
        _
    $region6: #{tpu_custom_call.1} parent=1 // loop_footer
      %s22 = sadd.s32 1, %s18
    $region7: #{tpu_custom_call.1} parent=1 // loop_footer_branch
      %17 = sbr.rel target = $region3
    $region8: #{tpu_custom_call.1} parent=1 // loop_exit
      _
    %297 = vsyncpa [#allocation5], 1
    %s298 = scalar_lea.sflag [#allocation5], 1
    %299 = vsyncpa %s298, 1
    %300 = vsyncpa [#allocation8], 1
    %301 = vsyncpa [#allocation6], 1
    %s302 = scalar_lea.sflag [#allocation6], 1
    %303 = vsyncpa %s302, 1

</llo_original>
